<compile_context>
chip_gen: v5e
topology: v5e:2x2
jax: 0.10.0
libtpu: 0.0.40
codegen_flags: <defaults>
</compile_context>

<pallas_src>
import functools

import jax
import jax.numpy as jnp
from jax.experimental import pallas as pl
from jax.experimental.pallas import tpu as pltpu

EPS = 1e-5


def _round_up(x, m):
    return (x + m - 1) // m * m


def _pick_vmem_limit():
    """Generation-aware VMEM limit (v5e/v6e: 128 MiB physical, v7x: 64 MiB per TC)."""
    try:
        cap = int(pltpu.get_tpu_info().vmem_capacity_bytes)
    except Exception:
        return 32 * 1024 * 1024
    return int(min(96 * 1024 * 1024, max(32 * 1024 * 1024, cap // 2)))


VMEM_LIMIT = _pick_vmem_limit()


# ----------------------------- kernels --------------------------------------

def _conv_relu_stats_kernel(p_ref, w_ref, b_ref, y_ref, sum_ref, sq_ref, *, hw_true):
    """Pass 1: y = relu(W @ P + b) (channels on sublanes); per-tile partial stats."""
    j = pl.program_id(1)
    y = jnp.dot(w_ref[...], p_ref[0], preferred_element_type=jnp.float32)
    y = jnp.maximum(y + b_ref[...], 0.0)                 # (Cout_p, t_hw) f32
    y_ref[0] = y.astype(y_ref.dtype)

    t_hw = y.shape[1]
    last = j == pl.num_programs(1) - 1

    # Only the last spatial tile can contain padded lanes -> mask only there.
    @pl.when(last)
    def _():
        col = j * t_hw + jax.lax.broadcasted_iota(jnp.int32, y.shape, 1)
        ym = jnp.where(col < hw_true, y, 0.0)
        sum_ref[0, 0] = jnp.sum(ym, axis=1, keepdims=True)
        sq_ref[0, 0] = jnp.sum(ym * ym, axis=1, keepdims=True)

    @pl.when(jnp.logical_not(last))
    def _():
        sum_ref[0, 0] = jnp.sum(y, axis=1, keepdims=True)
        sq_ref[0, 0] = jnp.sum(y * y, axis=1, keepdims=True)


def _bn_apply_kernel(y_ref, scale_ref, shift_ref, o_ref):
    """Pass 2: o = y * scale + shift (per-channel scale/shift on the sublane axis)."""
    o_ref[0] = y_ref[0].astype(jnp.float32) * scale_ref[...] + shift_ref[...]


# --------------------------- host-side helpers -------------------------------

def im2col_nchw_t(x, K, pad, Hout, Wout):
    """(N, Cin, H, W) -> (N, Cin*K*K, Hout*Wout), flatten order (cin, kh, kw)."""
    N, Cin, H, W = x.shape
    xp = jnp.pad(x, ((0, 0), (0, 0), (pad, pad), (pad, pad)))
    cols = [xp[:, :, kh:kh + Hout, kw:kw + Wout] for kh in range(K) for kw in range(K)]
    p = jnp.stack(cols, axis=2)                   # (N, Cin, K*K, Hout, Wout)
    return p.reshape(N, Cin * K * K, Hout * Wout)


@functools.partial(jax.jit, static_argnames=("K", "pad", "tile_hw", "compute_dtype"))
def conv_block_forward(x, weight, bias, gamma, beta, *, K, pad,
                       tile_hw=2048, compute_dtype=jnp.float32):
    N, Cin, H, W = x.shape
    Cout = weight.shape[0]
    Hout = H + 2 * pad - K + 1
    Wout = W + 2 * pad - K + 1
    HW = Hout * Wout
    Kdim = Cin * K * K
    M = N * HW                                    # true element count per channel

    Cout_p = _round_up(Cout, 8)                   # sublane-aligned channels (no 128 pad)
    t_hw = min(tile_hw, _round_up(HW, 128))       # lane-dense tile, multiple of 128
    HWp = _round_up(HW, t_hw)
    n_hw = HWp // t_hw
    isz = jnp.dtype(compute_dtype).itemsize

    # Operands: P (N, Kdim, HWp) with M on lanes; Wt (Cout_p, Kdim); bias (Cout_p, 1).
    P = im2col_nchw_t(x, K, pad, Hout, Wout).astype(compute_dtype)
    P = jnp.pad(P, ((0, 0), (0, 0), (0, HWp - HW)))
    Wt = jnp.pad(weight.reshape(Cout, Kdim),
                 ((0, Cout_p - Cout), (0, 0))).astype(compute_dtype)
    b2 = jnp.pad(bias.astype(jnp.float32), (0, Cout_p - Cout)).reshape(Cout_p, 1)

    # ---------------- pass 1: conv + bias + ReLU + per-tile partial stats ------
    kern1 = functools.partial(_conv_relu_stats_kernel, hw_true=HW)
    y_pad, ysum, ysq = pl.pallas_call(
        kern1,
        out_shape=(jax.ShapeDtypeStruct((N, Cout_p, HWp), compute_dtype),
                   jax.ShapeDtypeStruct((N, n_hw, Cout_p, 1), jnp.float32),
                   jax.ShapeDtypeStruct((N, n_hw, Cout_p, 1), jnp.float32)),
        grid=(N, n_hw),
        in_specs=[pl.BlockSpec((1, Kdim, t_hw), lambda n, j: (n, 0, j)),
                  pl.BlockSpec((Cout_p, Kdim), lambda n, j: (0, 0)),
                  pl.BlockSpec((Cout_p, 1), lambda n, j: (0, 0))],
        out_specs=(pl.BlockSpec((1, Cout_p, t_hw), lambda n, j: (n, 0, j)),
                   pl.BlockSpec((1, 1, Cout_p, 1), lambda n, j: (n, j, 0, 0)),
                   pl.BlockSpec((1, 1, Cout_p, 1), lambda n, j: (n, j, 0, 0))),
        compiler_params=pltpu.CompilerParams(
            dimension_semantics=("parallel", "parallel"),   # no revisit -> megacore-able
            vmem_limit_bytes=VMEM_LIMIT),
        cost_estimate=pl.CostEstimate(
            flops=2 * N * HWp * Kdim * Cout_p,
            transcendentals=0,
            bytes_accessed=isz * (N * Kdim * HWp + Cout_p * Kdim + N * Cout_p * HWp)
                           + 4 * (Cout_p + 2 * N * n_hw * Cout_p)),
    )(P, Wt, b2)

    # ---------------- tiny per-channel BN params (plain JAX) -------------------
    # NOTE: E[y^2] - E[y]^2 in f32; fine at these sizes (see review for a centered
    # two-pass variant if precision drifts at very large M).
    s1 = jnp.sum(ysum, axis=(0, 1))                        # (Cout_p, 1)
    s2 = jnp.sum(ysq, axis=(0, 1))
    mean = s1 / float(M)
    var = jnp.maximum(s2 / float(M) - mean * mean, 0.0)
    inv = jax.lax.rsqrt(var + EPS)
    g = jnp.pad(gamma.astype(jnp.float32), (0, Cout_p - Cout)).reshape(Cout_p, 1)
    bt = jnp.pad(beta.astype(jnp.float32), (0, Cout_p - Cout)).reshape(Cout_p, 1)
    scale = g * inv                                        # padded channels -> 0
    shift = bt - mean * scale

    # ---------------- pass 2: apply scale/shift (fully parallel) ---------------
    out_pad = pl.pallas_call(
        _bn_apply_kernel,
        out_shape=jax.ShapeDtypeStruct((N, Cout_p, HWp), jnp.float32),
        grid=(N, n_hw),
        in_specs=[pl.BlockSpec((1, Cout_p, t_hw), lambda n, j: (n, 0, j)),
                  pl.BlockSpec((Cout_p, 1), lambda n, j: (0, 0)),
                  pl.BlockSpec((Cout_p, 1), lambda n, j: (0, 0))],
        out_specs=pl.BlockSpec((1, Cout_p, t_hw), lambda n, j: (n, 0, j)),
        compiler_params=pltpu.CompilerParams(
            dimension_semantics=("parallel", "parallel"),
            vmem_limit_bytes=VMEM_LIMIT),
        cost_estimate=pl.CostEstimate(
            flops=2 * N * HWp * Cout_p,
            transcendentals=0,
            bytes_accessed=(isz + 4) * N * Cout_p * HWp + 2 * 4 * Cout_p),
    )(y_pad, scale, shift)

    # Already channel-major: just slice padding and reshape -> NCHW (no transpose).
    return out_pad[:, :Cout, :HW].reshape(N, Cout, Hout, Wout)


# ------------------------------ reference ------------------------------------

def reference_forward(x, weight, bias, gamma, beta, pad):
    y = jax.lax.conv_general_dilated(
        x, weight, window_strides=(1, 1), padding=[(pad, pad), (pad, pad)],
        dimension_numbers=("NCHW", "OIHW", "NCHW"))
    y = y + bias.reshape(1, -1, 1, 1)
    y = jnp.maximum(y, 0.0)
    mean = jnp.mean(y, axis=(0, 2, 3), keepdims=True)
    var = jnp.mean((y - mean) ** 2, axis=(0, 2, 3), keepdims=True)
    return (y - mean) * jax.lax.rsqrt(var + EPS) * gamma.reshape(1, -1, 1, 1) \
        + beta.reshape(1, -1, 1, 1)


if __name__ == "__main__":
    # ConvBlock(in_channels=4, out_channels=8, kernel_size=3, pad=1, bias=True, bn=True)
    N, Cin, H, W = 2, 4, 16, 16
    Cout, K, pad = 8, 3, 1

    key = jax.random.PRNGKey(0)
    kx, kw, kb, kg, kbt = jax.random.split(key, 5)
    x = jax.random.normal(kx, (N, Cin, H, W), dtype=jnp.float32)
    weight = jax.random.normal(kw, (Cout, Cin, K, K), dtype=jnp.float32) * 0.1
    bias = jax.random.normal(kb, (Cout,), dtype=jnp.float32) * 0.1
    gamma = 1.0 + 0.1 * jax.random.normal(kg, (Cout,), dtype=jnp.float32)
    beta = 0.1 * jax.random.normal(kbt, (Cout,), dtype=jnp.float32)

    ref = reference_forward(x, weight, bias, gamma, beta, pad)

    # f32 path: tight tolerance.
    out = conv_block_forward(x, weight, bias, gamma, beta, K=K, pad=pad,
                             compute_dtype=jnp.float32)
    out = jax.block_until_ready(out)
    assert out.shape == (N, Cout, H, W)
    assert jnp.allclose(out, ref, atol=1e-4, rtol=1e-4), "f32 mismatch vs reference"

    # bf16 operand path (f32 accumulation / stats): looser tolerance.
    out_bf16 = conv_block_forward(x, weight, bias, gamma, beta, K=K, pad=pad,
                                  compute_dtype=jnp.bfloat16)
    out_bf16 = jax.block_until_ready(out_bf16)
    assert jnp.allclose(out_bf16, ref, atol=5e-2, rtol=5e-2), "bf16 mismatch vs reference"

    print("KERNEL_OK")
</pallas_src>

<mosaic_0001>
module attributes {stable_mosaic.version = 11 : i64} {
  func.func @_conv_relu_stats_kernel(%arg0: i32, %arg1: i32, %arg2: memref<1x36x256xf32, #tpu.memory_space<vmem>>, %arg3: memref<8x36xf32, #tpu.memory_space<vmem>>, %arg4: memref<8x1xf32, #tpu.memory_space<vmem>>, %arg5: memref<1x8x256xf32, #tpu.memory_space<vmem>>, %arg6: memref<1x1x8x1xf32, #tpu.memory_space<vmem>>, %arg7: memref<1x1x8x1xf32, #tpu.memory_space<vmem>>) attributes {dimension_semantics = [#tpu.dimension_semantics<parallel>, #tpu.dimension_semantics<parallel>], iteration_bounds = array<i64: 2, 1>, scalar_prefetch = 0 : i64, scratch_operands = 0 : i64, tpu.core_type = #tpu.core_type<tc>, window_params = [{transform_indices = @transform_0, window_bounds = array<i64: 1, 36, 256>}, {pipeline_mode = #tpu.pipeline_mode<synchronous>, transform_indices = @transform_1, window_bounds = array<i64: 8, 36>}, {pipeline_mode = #tpu.pipeline_mode<synchronous>, transform_indices = @transform_2, window_bounds = array<i64: 8, 1>}, {transform_indices = @transform_3, window_bounds = array<i64: 1, 8, 256>}, {transform_indices = @transform_4, window_bounds = array<i64: 1, 1, 8, 1>}, {transform_indices = @transform_5, window_bounds = array<i64: 1, 1, 8, 1>}]} {
    %c0 = arith.constant 0 : index
    %c0_0 = arith.constant 0 : index
    %0 = vector.load %arg3[%c0, %c0_0] : memref<8x36xf32, #tpu.memory_space<vmem>>, vector<8x36xf32>
    %c0_1 = arith.constant 0 : index
    %c0_2 = arith.constant 0 : index
    %c0_3 = arith.constant 0 : index
    %1 = vector.load %arg2[%c0_1, %c0_2, %c0_3] : memref<1x36x256xf32, #tpu.memory_space<vmem>>, vector<1x36x256xf32>
    %2 = vector.shape_cast %1 : vector<1x36x256xf32> to vector<36x256xf32>
    %cst = arith.constant dense<0.000000e+00> : vector<8x256xf32>
    %3 = tpu.matmul %0, %2, %cst {dimension_numbers = #tpu.dot_dimension_numbers<[1], [0], [0], [1], [0, 0, 1, 1], [], []>} : vector<8x36xf32>, vector<36x256xf32>, vector<8x256xf32> -> vector<8x256xf32>
    %c0_4 = arith.constant 0 : index
    %c0_5 = arith.constant 0 : index
    %4 = vector.load %arg4[%c0_4, %c0_5] : memref<8x1xf32, #tpu.memory_space<vmem>>, vector<8x1xf32>
    %5 = vector.broadcast %4 : vector<8x1xf32> to vector<8x256xf32>
    %6 = arith.addf %3, %5 : vector<8x256xf32>
    %cst_6 = arith.constant 0.000000e+00 : f32
    %7 = vector.broadcast %cst_6 : f32 to vector<8x256xf32>
    %8 = arith.maximumf %6, %7 : vector<8x256xf32>
    %c0_7 = arith.constant 0 : index
    %c0_8 = arith.constant 0 : index
    %c0_9 = arith.constant 0 : index
    %9 = vector.load %arg5[%c0_7, %c0_8, %c0_9] : memref<1x8x256xf32, #tpu.memory_space<vmem>>, vector<1x8x256xf32>
    %10 = vector.shape_cast %9 : vector<1x8x256xf32> to vector<8x256xf32>
    %11 = vector.shape_cast %8 : vector<8x256xf32> to vector<1x8x256xf32>
    tpu.vector_store %arg5[%c0_7, %c0_8, %c0_9], %11 {strides = array<i32>} : memref<1x8x256xf32, #tpu.memory_space<vmem>>, vector<1x8x256xf32>,
    %c0_i32 = arith.constant 0 : i32
    %12 = arith.cmpi eq, %arg1, %c0_i32 : i32
    %13 = arith.extui %12 : i1 to i32
    %c0_i32_10 = arith.constant 0 : i32
    %14 = arith.cmpi ne, %13, %c0_i32_10 : i32
    scf.if %14 {
      %c256_i32 = arith.constant 256 : i32
      %18 = arith.muli %arg1, %c256_i32 : i32
      %19 = tpu.iota {dimensions = array<i32: 1>} : vector<8x256xi32>
      %20 = vector.broadcast %18 : i32 to vector<8x256xi32>
      %21 = arith.addi %20, %19 : vector<8x256xi32>
      %c256_i32_12 = arith.constant 256 : i32
      %22 = vector.broadcast %c256_i32_12 : i32 to vector<8x256xi32>
      %23 = arith.cmpi slt, %21, %22 : vector<8x256xi32>
      %cst_13 = arith.constant 0.000000e+00 : f32
      %24 = vector.broadcast %cst_13 : f32 to vector<8x256xf32>
      %25 = arith.select %23, %8, %24 : vector<8x256xi1>, vector<8x256xf32>
      %cst_14 = arith.constant dense<0.000000e+00> : vector<8xf32>
      %26 = vector.multi_reduction <add>, %25, %cst_14 [1] : vector<8x256xf32> to vector<8xf32>
      %27 = vector.shape_cast %26 : vector<8xf32> to vector<8x1xf32>
      %c0_15 = arith.constant 0 : index
      %c0_16 = arith.constant 0 : index
      %c0_17 = arith.constant 0 : index
      %c0_18 = arith.constant 0 : index
      %28 = vector.load %arg6[%c0_15, %c0_16, %c0_17, %c0_18] : memref<1x1x8x1xf32, #tpu.memory_space<vmem>>, vector<1x1x8x1xf32>
      %29 = vector.shape_cast %28 : vector<1x1x8x1xf32> to vector<8x1xf32>
      %30 = vector.shape_cast %27 : vector<8x1xf32> to vector<1x1x8x1xf32>
      tpu.vector_store %arg6[%c0_15, %c0_16, %c0_17, %c0_18], %30 {strides = array<i32>} : memref<1x1x8x1xf32, #tpu.memory_space<vmem>>, vector<1x1x8x1xf32>,
      %31 = arith.mulf %25, %25 : vector<8x256xf32>
      %cst_19 = arith.constant dense<0.000000e+00> : vector<8xf32>
      %32 = vector.multi_reduction <add>, %31, %cst_19 [1] : vector<8x256xf32> to vector<8xf32>
      %33 = vector.shape_cast %32 : vector<8xf32> to vector<8x1xf32>
      %c0_20 = arith.constant 0 : index
      %c0_21 = arith.constant 0 : index
      %c0_22 = arith.constant 0 : index
      %c0_23 = arith.constant 0 : index
      %34 = vector.load %arg7[%c0_20, %c0_21, %c0_22, %c0_23] : memref<1x1x8x1xf32, #tpu.memory_space<vmem>>, vector<1x1x8x1xf32>
      %35 = vector.shape_cast %34 : vector<1x1x8x1xf32> to vector<8x1xf32>
      %36 = vector.shape_cast %33 : vector<8x1xf32> to vector<1x1x8x1xf32>
      tpu.vector_store %arg7[%c0_20, %c0_21, %c0_22, %c0_23], %36 {strides = array<i32>} : memref<1x1x8x1xf32, #tpu.memory_space<vmem>>, vector<1x1x8x1xf32>,
    } else {
    }
    %true = arith.constant true
    %15 = arith.xori %12, %true : i1
    %16 = arith.extui %15 : i1 to i32
    %c0_i32_11 = arith.constant 0 : i32
    %17 = arith.cmpi ne, %16, %c0_i32_11 : i32
    scf.if %17 {
      %cst_12 = arith.constant dense<0.000000e+00> : vector<8xf32>
      %18 = vector.multi_reduction <add>, %8, %cst_12 [1] : vector<8x256xf32> to vector<8xf32>
      %19 = vector.shape_cast %18 : vector<8xf32> to vector<8x1xf32>
      %c0_13 = arith.constant 0 : index
      %c0_14 = arith.constant 0 : index
      %c0_15 = arith.constant 0 : index
      %c0_16 = arith.constant 0 : index
      %20 = vector.load %arg6[%c0_13, %c0_14, %c0_15, %c0_16] : memref<1x1x8x1xf32, #tpu.memory_space<vmem>>, vector<1x1x8x1xf32>
      %21 = vector.shape_cast %20 : vector<1x1x8x1xf32> to vector<8x1xf32>
      %22 = vector.shape_cast %19 : vector<8x1xf32> to vector<1x1x8x1xf32>
      tpu.vector_store %arg6[%c0_13, %c0_14, %c0_15, %c0_16], %22 {strides = array<i32>} : memref<1x1x8x1xf32, #tpu.memory_space<vmem>>, vector<1x1x8x1xf32>,
      %23 = arith.mulf %8, %8 : vector<8x256xf32>
      %cst_17 = arith.constant dense<0.000000e+00> : vector<8xf32>
      %24 = vector.multi_reduction <add>, %23, %cst_17 [1] : vector<8x256xf32> to vector<8xf32>
      %25 = vector.shape_cast %24 : vector<8xf32> to vector<8x1xf32>
      %c0_18 = arith.constant 0 : index
      %c0_19 = arith.constant 0 : index
      %c0_20 = arith.constant 0 : index
      %c0_21 = arith.constant 0 : index
      %26 = vector.load %arg7[%c0_18, %c0_19, %c0_20, %c0_21] : memref<1x1x8x1xf32, #tpu.memory_space<vmem>>, vector<1x1x8x1xf32>
      %27 = vector.shape_cast %26 : vector<1x1x8x1xf32> to vector<8x1xf32>
      %28 = vector.shape_cast %25 : vector<8x1xf32> to vector<1x1x8x1xf32>
      tpu.vector_store %arg7[%c0_18, %c0_19, %c0_20, %c0_21], %28 {strides = array<i32>} : memref<1x1x8x1xf32, #tpu.memory_space<vmem>>, vector<1x1x8x1xf32>,
    } else {
    }
    return
  }
  func.func @transform_0(%arg0: i32, %arg1: i32) -> (i32, i32, i32) {
    %c0_i32 = arith.constant 0 : i32
    %c0_i32_0 = arith.constant 0 : i32
    return %arg0, %c0_i32, %arg1 : i32, i32, i32
  }
  func.func @transform_1(%arg0: i32, %arg1: i32) -> (i32, i32) {
    %c0_i32 = arith.constant 0 : i32
    %c0_i32_0 = arith.constant 0 : i32
    %c0_i32_1 = arith.constant 0 : i32
    return %c0_i32, %c0_i32_0 : i32, i32
  }
  func.func @transform_2(%arg0: i32, %arg1: i32) -> (i32, i32) {
    %c0_i32 = arith.constant 0 : i32
    %c0_i32_0 = arith.constant 0 : i32
    %c0_i32_1 = arith.constant 0 : i32
    return %c0_i32, %c0_i32_0 : i32, i32
  }
  func.func @transform_3(%arg0: i32, %arg1: i32) -> (i32, i32, i32) {
    %c0_i32 = arith.constant 0 : i32
    %c0_i32_0 = arith.constant 0 : i32
    return %arg0, %c0_i32, %arg1 : i32, i32, i32
  }
  func.func @transform_4(%arg0: i32, %arg1: i32) -> (i32, i32, i32, i32) {
    %c0_i32 = arith.constant 0 : i32
    %c0_i32_0 = arith.constant 0 : i32
    %c0_i32_1 = arith.constant 0 : i32
    return %arg0, %arg1, %c0_i32, %c0_i32_0 : i32, i32, i32, i32
  }
  func.func @transform_5(%arg0: i32, %arg1: i32) -> (i32, i32, i32, i32) {
    %c0_i32 = arith.constant 0 : i32
    %c0_i32_0 = arith.constant 0 : i32
    %c0_i32_1 = arith.constant 0 : i32
    return %arg0, %arg1, %c0_i32, %c0_i32_0 : i32, i32, i32, i32
  }
}

module attributes {stable_mosaic.version = 11 : i64} {
  func.func @_bn_apply_kernel(%arg0: i32, %arg1: i32, %arg2: memref<1x8x256xf32, #tpu.memory_space<vmem>>, %arg3: memref<8x1xf32, #tpu.memory_space<vmem>>, %arg4: memref<8x1xf32, #tpu.memory_space<vmem>>, %arg5: memref<1x8x256xf32, #tpu.memory_space<vmem>>) attributes {dimension_semantics = [#tpu.dimension_semantics<parallel>, #tpu.dimension_semantics<parallel>], iteration_bounds = array<i64: 2, 1>, scalar_prefetch = 0 : i64, scratch_operands = 0 : i64, tpu.core_type = #tpu.core_type<tc>, window_params = [{transform_indices = @transform_0, window_bounds = array<i64: 1, 8, 256>}, {pipeline_mode = #tpu.pipeline_mode<synchronous>, transform_indices = @transform_1, window_bounds = array<i64: 8, 1>}, {pipeline_mode = #tpu.pipeline_mode<synchronous>, transform_indices = @transform_2, window_bounds = array<i64: 8, 1>}, {transform_indices = @transform_3, window_bounds = array<i64: 1, 8, 256>}]} {
    %c0 = arith.constant 0 : index
    %c0_0 = arith.constant 0 : index
    %c0_1 = arith.constant 0 : index
    %0 = vector.load %arg2[%c0, %c0_0, %c0_1] : memref<1x8x256xf32, #tpu.memory_space<vmem>>, vector<1x8x256xf32>
    %1 = vector.shape_cast %0 : vector<1x8x256xf32> to vector<8x256xf32>
    %c0_2 = arith.constant 0 : index
    %c0_3 = arith.constant 0 : index
    %2 = vector.load %arg3[%c0_2, %c0_3] : memref<8x1xf32, #tpu.memory_space<vmem>>, vector<8x1xf32>
    %3 = vector.broadcast %2 : vector<8x1xf32> to vector<8x256xf32>
    %4 = arith.mulf %1, %3 : vector<8x256xf32>
    %c0_4 = arith.constant 0 : index
    %c0_5 = arith.constant 0 : index
    %5 = vector.load %arg4[%c0_4, %c0_5] : memref<8x1xf32, #tpu.memory_space<vmem>>, vector<8x1xf32>
    %6 = vector.broadcast %5 : vector<8x1xf32> to vector<8x256xf32>
    %7 = arith.addf %4, %6 : vector<8x256xf32>
    %c0_6 = arith.constant 0 : index
    %c0_7 = arith.constant 0 : index
    %c0_8 = arith.constant 0 : index
    %8 = vector.load %arg5[%c0_6, %c0_7, %c0_8] : memref<1x8x256xf32, #tpu.memory_space<vmem>>, vector<1x8x256xf32>
    %9 = vector.shape_cast %8 : vector<1x8x256xf32> to vector<8x256xf32>
    %10 = vector.shape_cast %7 : vector<8x256xf32> to vector<1x8x256xf32>
    tpu.vector_store %arg5[%c0_6, %c0_7, %c0_8], %10 {strides = array<i32>} : memref<1x8x256xf32, #tpu.memory_space<vmem>>, vector<1x8x256xf32>,
    return
  }
  func.func @transform_0(%arg0: i32, %arg1: i32) -> (i32, i32, i32) {
    %c0_i32 = arith.constant 0 : i32
    %c0_i32_0 = arith.constant 0 : i32
    return %arg0, %c0_i32, %arg1 : i32, i32, i32
  }
  func.func @transform_1(%arg0: i32, %arg1: i32) -> (i32, i32) {
    %c0_i32 = arith.constant 0 : i32
    %c0_i32_0 = arith.constant 0 : i32
    %c0_i32_1 = arith.constant 0 : i32
    return %c0_i32, %c0_i32_0 : i32, i32
  }
  func.func @transform_2(%arg0: i32, %arg1: i32) -> (i32, i32) {
    %c0_i32 = arith.constant 0 : i32
    %c0_i32_0 = arith.constant 0 : i32
    %c0_i32_1 = arith.constant 0 : i32
    return %c0_i32, %c0_i32_0 : i32, i32
  }
  func.func @transform_3(%arg0: i32, %arg1: i32) -> (i32, i32, i32) {
    %c0_i32 = arith.constant 0 : i32
    %c0_i32_0 = arith.constant 0 : i32
    return %arg0, %c0_i32, %arg1 : i32, i32, i32
  }
}

</mosaic_0001>

<llo_original>
// kernel: conv_block_forward.3
$region0: #{conv_block_forward.3}
  #allocation0 [shape = 'u32[]', space=smem, size = 0x4, offset = 0x4, fixed_abs, tag = 'smem constant byte address 0x4 - core index']
  #allocation1 [shape = 'u32[72,128]{1,0:T(1,128)}', space=vmem, size = 0x9000, scoped, tag = 'internal scratch']
  %s0 = inlined_call_operand.vmem [shape: f32[2,8,256], index: 0, kind: input, shape index: {}]
  %s1 = inlined_call_operand.vmem [shape: f32[8,1], index: 1, kind: input, shape index: {}]
  %s2 = inlined_call_operand.vmem [shape: f32[8,1], index: 2, kind: input, shape index: {}]
  %s3 = inlined_call_operand.vmem [shape: f32[2,8,256], index: 3, kind: output, shape index: {}]
  %s4 = sld [smem:[#allocation0]]
  $region45: #{conv_block_forward.3} parent=0
    _
  %s6 = ssub.s32 1, %s4
  %s7 = scalar_select 0, %s6, %s4
  loop: start=0, step=1, limit=4
  $region2: #{conv_block_forward.3} parent=0 // loop_pre_header
    _
  $region3: #{conv_block_forward.3} parent=0 // loop_header
    %s9 = sphi 0, %s13
    %p10 = scmp.ge.s32.totalorder %s9, 4
    %s16 = sphi 0, %s28
    %s17 = sphi 0, %s24
    %s18 = sphi 0, %s16
    %s19 = sphi 0, %s17
    %s20 = sphi 0, %s18
    %s21 = sphi 0, %s19
    %s33 = sphi 0, %s35
    %s36 = sphi 0, %s33
    %s37 = sphi 0, %s36
    %s53 = sphi 0, %s37
    %s57 = sphi 0, %s57
    %s59 = sphi 0, %s57
    %s60 = sphi 0, %s59
    %s74 = sphi 0, %s60
    %s78 = sphi 0, %s78
    %s80 = sphi 0, %s78
    %s81 = sphi 0, %s80
    %s95 = sphi 0, %s81
    %s103 = sphi 0, %s105
    %s106 = sphi 0, %s103
    %s107 = sphi 0, %s106
    %s123 = sphi 0, %s107
  $region4: #{conv_block_forward.3} parent=0 // loop_header_branch
    %12 = sbr.rel (%p10) target = $region8
  $region5: #{conv_block_forward.3} parent=0 // loop_body
    %s14 = ssub.s32 %s9, 1
    %s15 = ssub.s32 %s9, 2
    %s22 = sadd.s32 1, %s17
    %p23 = scmp.ge.s32.totalorder %s22, 1
    %s24 = scalar_select %p23, 0, %s22
    %s25 = sadd.s32 1, %s16
    %s26 = scalar_select %p23, %s25, %s16
    %p27 = scmp.ge.s32.totalorder %s26, 2
    %s28 = scalar_select %p27, 0, %s26
    %s29 = ssub.s32 %s16, %s28
    %s30 = ssub.s32 %s17, %s24
    %s31 = sor.u32 %s29, %s30
    %p32 = scmp.eq.s32.totalorder %s31, 0
    %s34 = sadd.s32 %s33, 1
    %s35 = scalar_select %p32, %s33, %s34
    %p38 = pneg %p32
    %p39 = scmp.eq.s32.totalorder %s9, 1
    %p40 = por %p38, %p39
    %p41 = scmp.ne.s32.totalorder %s33, %s36
    %p42 = scmp.eq.s32.totalorder %s9, 0
    %p43 = por %p41, %p42
    %p44 = scmp.ne.s32.totalorder %s33, %s36
    %p45 = scmp.eq.s32.totalorder %s14, 1
    %p46 = por %p44, %p45
    %p47 = scmp.ne.s32.totalorder %s36, %s37
    %p48 = scmp.eq.s32.totalorder %s14, 0
    %p49 = por %p47, %p48
    %p50 = scmp.ne.s32.totalorder %s36, %s37
    %p51 = scmp.eq.s32.totalorder %s15, 1
    %p52 = por %p50, %p51
    %p54 = scmp.ne.s32.totalorder %s37, %s53
    %p55 = scmp.eq.s32.totalorder %s15, 0
    %p56 = por %p54, %p55
    %s58 = sadd.s32 %s57, 1
    %p61 = scmp.eq.s32.totalorder %s9, 1
    %p62 = scmp.ne.s32.totalorder %s57, %s59
    %p63 = scmp.eq.s32.totalorder %s9, 0
    %p64 = por %p62, %p63
    %p65 = scmp.ne.s32.totalorder %s57, %s59
    %p66 = scmp.eq.s32.totalorder %s14, 1
    %p67 = por %p65, %p66
    %p68 = scmp.ne.s32.totalorder %s59, %s60
    %p69 = scmp.eq.s32.totalorder %s14, 0
    %p70 = por %p68, %p69
    %p71 = scmp.ne.s32.totalorder %s59, %s60
    %p72 = scmp.eq.s32.totalorder %s15, 1
    %p73 = por %p71, %p72
    %p75 = scmp.ne.s32.totalorder %s60, %s74
    %p76 = scmp.eq.s32.totalorder %s15, 0
    %p77 = por %p75, %p76
    %s79 = sadd.s32 %s78, 1
    %p82 = scmp.eq.s32.totalorder %s9, 1
    %p83 = scmp.ne.s32.totalorder %s78, %s80
    %p84 = scmp.eq.s32.totalorder %s9, 0
    %p85 = por %p83, %p84
    %p86 = scmp.ne.s32.totalorder %s78, %s80
    %p87 = scmp.eq.s32.totalorder %s14, 1
    %p88 = por %p86, %p87
    %p89 = scmp.ne.s32.totalorder %s80, %s81
    %p90 = scmp.eq.s32.totalorder %s14, 0
    %p91 = por %p89, %p90
    %p92 = scmp.ne.s32.totalorder %s80, %s81
    %p93 = scmp.eq.s32.totalorder %s15, 1
    %p94 = por %p92, %p93
    %p96 = scmp.ne.s32.totalorder %s81, %s95
    %p97 = scmp.eq.s32.totalorder %s15, 0
    %p98 = por %p96, %p97
    %s99 = ssub.s32 %s16, %s28
    %s100 = ssub.s32 %s17, %s24
    %s101 = sor.u32 %s99, %s100
    %p102 = scmp.eq.s32.totalorder %s101, 0
    %s104 = sadd.s32 %s103, 1
    %s105 = scalar_select %p102, %s103, %s104
    %p108 = pneg %p102
    %p109 = scmp.eq.s32.totalorder %s9, 1
    %p110 = por %p108, %p109
    %p111 = scmp.ne.s32.totalorder %s103, %s106
    %p112 = scmp.eq.s32.totalorder %s9, 0
    %p113 = por %p111, %p112
    %p114 = scmp.ne.s32.totalorder %s103, %s106
    %p115 = scmp.eq.s32.totalorder %s14, 1
    %p116 = por %p114, %p115
    %p117 = scmp.ne.s32.totalorder %s106, %s107
    %p118 = scmp.eq.s32.totalorder %s14, 0
    %p119 = por %p117, %p118
    %p120 = scmp.ne.s32.totalorder %s106, %s107
    %p121 = scmp.eq.s32.totalorder %s15, 1
    %p122 = por %p120, %p121
    %p124 = scmp.ne.s32.totalorder %s107, %s123
    %p125 = scmp.eq.s32.totalorder %s15, 0
    %p126 = por %p124, %p125
    %p127 = scmp.le.s32.totalorder 1, %s9
    %p128 = scmp.lt.s32.totalorder %s9, 3
    %p129 = pnand %p127, %p128
    %p130 = pneg %p129
    // Predicated region
    $region9: #{conv_block_forward.3} parent=5 // pred_check
      _
    $region10: #{conv_block_forward.3} parent=5 // pred_check_branch
      %132 = sbr.rel (%p129) target = $region12
    $region11: #{conv_block_forward.3} parent=5 // pred_region
      %s133 = ssub.s32 %s9, 1
      // Predicated region
      $region13: #{conv_block_forward.3} parent=11 // pred_check
        %p134 = pneg %p70
      $region14: #{conv_block_forward.3} parent=11 // pred_check_branch
        %136 = sbr.rel (%p134) target = $region16
      $region15: #{conv_block_forward.3} parent=11 // pred_region
        _
      $region16: #{conv_block_forward.3} parent=11 // pred_fallthru
        _
      // Predicated region
      $region17: #{conv_block_forward.3} parent=11 // pred_check
        %p137 = pneg %p91
      $region18: #{conv_block_forward.3} parent=11 // pred_check_branch
        %139 = sbr.rel (%p137) target = $region20
      $region19: #{conv_block_forward.3} parent=11 // pred_region
        _
      $region20: #{conv_block_forward.3} parent=11 // pred_fallthru
        _
    $region12: #{conv_block_forward.3} parent=5 // pred_fallthru
      _
    %p140 = scmp.lt.s32.totalorder %s9, 2
    // Predicated region
    $region21: #{conv_block_forward.3} parent=5 // pred_check
      %p141 = pneg %p140
    $region22: #{conv_block_forward.3} parent=5 // pred_check_branch
      %143 = sbr.rel (%p141) target = $region24
    $region23: #{conv_block_forward.3} parent=5 // pred_region
      // Predicated region
      $region25: #{conv_block_forward.3} parent=23 // pred_check
        %p144 = pneg %p43
      $region26: #{conv_block_forward.3} parent=23 // pred_check_branch
        %146 = sbr.rel (%p144) target = $region28
      $region27: #{conv_block_forward.3} parent=23 // pred_region
        %s147 = smul.u32 2, %s17
        %p148 = scmp.lt.s32.totalorder %s16, 1
        %s149 = scalar_select %p148, %s16, 1
        %p150 = scmp.lt.s32.totalorder %s147, 1
        %s151 = scalar_select %p150, %s147, 1
        %s152 = smul.addr %s149, 2
        %s153 = sadd.s32 %s151, %s152
        %s154 = smul.addr %s153, 8
        %s155 = scalar_lea.vmem %s0, %s154
        %s156 = smul.u32 2, %s17
      $region28: #{conv_block_forward.3} parent=23 // pred_fallthru
        _
    $region24: #{conv_block_forward.3} parent=5 // pred_fallthru
      _
    %p157 = scmp.le.s32.totalorder 1, %s9
    %p158 = scmp.lt.s32.totalorder %s9, 3
    %p159 = pnand %p157, %p158
    %p160 = pneg %p159
    // Predicated region
    $region29: #{conv_block_forward.3} parent=5 // pred_check
      _
    $region30: #{conv_block_forward.3} parent=5 // pred_check_branch
      %162 = sbr.rel (%p159) target = $region32
    $region31: #{conv_block_forward.3} parent=5 // pred_region
      %s163 = ssub.s32 %s9, 1
      %s164 = smul.u32 2, %s19
      %p165 = scmp.lt.s32.totalorder %s18, 1
      %s166 = scalar_select %p165, %s18, 1
      %p167 = scmp.lt.s32.totalorder %s164, 1
      %s168 = scalar_select %p167, %s164, 1
      %s169 = smul.addr %s166, 2
      %s170 = sadd.s32 %s168, %s169
      %s171 = smul.addr %s170, 8
      %s172 = scalar_lea.vmem %s0, %s171
      %p173 = pneg %p49
      %p174 = pneg %p46
      %p175 = pneg %p70
      %p176 = pneg %p67
      %p177 = pneg %p91
      %p178 = pneg %p88
      %p179 = pneg %p119
      %p180 = pneg %p116
      %s181 = smul.u32 2, %s19
      %p182 = scmp.lt.s32.totalorder %s18, 1
      %s183 = scalar_select %p182, %s18, 1
      %p184 = scmp.lt.s32.totalorder %s181, 1
      %s185 = scalar_select %p184, %s181, 1
      %s186 = smul.addr %s183, 2
      %s187 = sadd.s32 %s185, %s186
      %s188 = smul.addr %s187, 8
      %s189 = scalar_lea.vmem %s3, %s188
      %s190 = smul.u32 2, %s19
      %p191 = scmp.lt.s32.totalorder %s18, 1
      %s192 = scalar_select %p191, %s18, 1
      %p193 = scmp.lt.s32.totalorder %s190, 1
      %s194 = scalar_select %p193, %s190, 1
      %s195 = smul.addr %s192, 2
      %s196 = sadd.s32 %s194, %s195
      %s197 = smul.addr %s196, 8
      %s198 = scalar_lea.vmem %s0, %s197
      %s199 = smul.u32 2, %s19
      %s200 = smul.u32 2, %s19
      %p201 = scmp.lt.s32.totalorder %s18, 1
      %s202 = scalar_select %p201, %s18, 1
      %p203 = scmp.lt.s32.totalorder %s200, 1
      %s204 = scalar_select %p203, %s200, 1
      %s205 = smul.addr %s202, 2
      %s206 = sadd.s32 %s204, %s205
      %s207 = smul.addr %s206, 8
      %s208 = scalar_lea.vmem %s3, %s207
      %s209 = smul.u32 2, %s19
      %v210 = vld [vmem:[%s198] sm:$0xff]
      %v211 = vld [vmem:[%s198 + $0x8] sm:$0xff]
      %v212 = vld [vmem:[%s1] sm:$0xff]
      %214 = vset.pattern.permute.xlu0 0
      %215 = vperm.xlu0 %214, %v212
      %v216 = vpop.permute.xlu0 %215
      %v218 = vmul.f32 %v210, %v216
      %v219 = vmul.f32 %v211, %v216
      %v220 = vld [vmem:[%s2] sm:$0xff]
      %222 = vset.pattern.permute.xlu0 0
      %223 = vperm.xlu0 %222, %v220
      %v224 = vpop.permute.xlu0 %223
      %v226 = vadd.f32 %v218, %v224
      %v227 = vadd.f32 %v219, %v224
      %228 = vst [vmem:[%s208] sm:$0xff] %v226
      %229 = vst [vmem:[%s208 + $0x8] sm:$0xff] %v227
      %s230 = smul.u32 2, %s19
      %p231 = scmp.lt.s32.totalorder %s18, 1
      %s232 = scalar_select %p231, %s18, 1
      %p233 = scmp.lt.s32.totalorder %s230, 1
      %s234 = scalar_select %p233, %s230, 1
      %s235 = smul.addr %s232, 2
      %s236 = sadd.s32 %s234, %s235
      %s237 = smul.addr %s236, 8
      %s238 = scalar_lea.vmem %s3, %s237
      // Predicated region
      $region33: #{conv_block_forward.3} parent=31 // pred_check
        %p239 = pneg %p116
      $region34: #{conv_block_forward.3} parent=31 // pred_check_branch
        %241 = sbr.rel (%p239) target = $region36
      $region35: #{conv_block_forward.3} parent=31 // pred_region
        %s242 = smul.u32 2, %s19
      $region36: #{conv_block_forward.3} parent=31 // pred_fallthru
        _
    $region32: #{conv_block_forward.3} parent=5 // pred_fallthru
      _
    %p243 = scmp.le.s32.totalorder 2, %s9
    // Predicated region
    $region37: #{conv_block_forward.3} parent=5 // pred_check
      %p244 = pneg %p243
    $region38: #{conv_block_forward.3} parent=5 // pred_check_branch
      %246 = sbr.rel (%p244) target = $region40
    $region39: #{conv_block_forward.3} parent=5 // pred_region
      %s247 = ssub.s32 %s9, 2
      // Predicated region
      $region41: #{conv_block_forward.3} parent=39 // pred_check
        %p248 = pneg %p122
      $region42: #{conv_block_forward.3} parent=39 // pred_check_branch
        %250 = sbr.rel (%p248) target = $region44
      $region43: #{conv_block_forward.3} parent=39 // pred_region
        %s251 = smul.u32 2, %s21
        %p252 = scmp.lt.s32.totalorder %s20, 1
        %s253 = scalar_select %p252, %s20, 1
        %p254 = scmp.lt.s32.totalorder %s251, 1
        %s255 = scalar_select %p254, %s251, 1
        %s256 = smul.addr %s253, 2
        %s257 = sadd.s32 %s255, %s256
        %s258 = smul.addr %s257, 8
        %s259 = scalar_lea.vmem %s3, %s258
      $region44: #{conv_block_forward.3} parent=39 // pred_fallthru
        _
    $region40: #{conv_block_forward.3} parent=5 // pred_fallthru
      _
  $region6: #{conv_block_forward.3} parent=0 // loop_footer
    %s13 = sadd.s32 1, %s9
  $region7: #{conv_block_forward.3} parent=0 // loop_footer_branch
    %8 = sbr.rel target = $region3
  $region8: #{conv_block_forward.3} parent=0 // loop_exit
    _

// kernel: conv_block_forward.2
$region0: #{conv_block_forward.2}
  #allocation0 [shape = 'u32[]', space=smem, size = 0x4, offset = 0x4, fixed_abs, tag = 'smem constant byte address 0x4 - core index']
  #allocation1 [shape = 'u32[72,128]{1,0:T(1,128)}', space=vmem, size = 0x9000, scoped, tag = 'internal scratch']
  %s0 = inlined_call_operand.vmem [shape: f32[2,36,256], index: 0, kind: input, shape index: {}]
  %s1 = inlined_call_operand.vmem [shape: f32[8,36], index: 1, kind: input, shape index: {}]
  %s2 = inlined_call_operand.vmem [shape: f32[8,1], index: 2, kind: input, shape index: {}]
  %s3 = inlined_call_operand.vmem [shape: f32[2,8,256], index: 3, kind: output, shape index: {0}]
  %s4 = inlined_call_operand.vmem [shape: f32[2,1,8,1], index: 4, kind: output, shape index: {1}]
  %s5 = inlined_call_operand.vmem [shape: f32[2,1,8,1], index: 5, kind: output, shape index: {2}]
  %6 = xla_tuple %s3, %s4, %s5
  %s7 = sld [smem:[#allocation0]]
  $region69: #{conv_block_forward.2} parent=0
    _
  %s9 = ssub.s32 1, %s7
  %s10 = scalar_select 0, %s9, %s7
  loop: start=0, step=1, limit=4
  $region2: #{conv_block_forward.2} parent=0 // loop_pre_header
    _
  $region3: #{conv_block_forward.2} parent=0 // loop_header
    %s12 = sphi 0, %s16
    %p13 = scmp.ge.s32.totalorder %s12, 4
    %s19 = sphi 0, %s31
    %s20 = sphi 0, %s27
    %s21 = sphi 0, %s19
    %s22 = sphi 0, %s20
    %s23 = sphi 0, %s21
    %s24 = sphi 0, %s22
    %s36 = sphi 0, %s38
    %s39 = sphi 0, %s36
    %s40 = sphi 0, %s39
    %s56 = sphi 0, %s40
    %s60 = sphi 0, %s60
    %s62 = sphi 0, %s60
    %s63 = sphi 0, %s62
    %s77 = sphi 0, %s63
    %s81 = sphi 0, %s81
    %s83 = sphi 0, %s81
    %s84 = sphi 0, %s83
    %s98 = sphi 0, %s84
    %s106 = sphi 0, %s108
    %s109 = sphi 0, %s106
    %s110 = sphi 0, %s109
    %s126 = sphi 0, %s110
    %s134 = sphi 0, %s136
    %s137 = sphi 0, %s134
    %s138 = sphi 0, %s137
    %s154 = sphi 0, %s138
    %s162 = sphi 0, %s164
    %s165 = sphi 0, %s162
    %s166 = sphi 0, %s165
    %s182 = sphi 0, %s166
  $region4: #{conv_block_forward.2} parent=0 // loop_header_branch
    %15 = sbr.rel (%p13) target = $region8
  $region5: #{conv_block_forward.2} parent=0 // loop_body
    %s17 = ssub.s32 %s12, 1
    %s18 = ssub.s32 %s12, 2
    %s25 = sadd.s32 1, %s20
    %p26 = scmp.ge.s32.totalorder %s25, 1
    %s27 = scalar_select %p26, 0, %s25
    %s28 = sadd.s32 1, %s19
    %s29 = scalar_select %p26, %s28, %s19
    %p30 = scmp.ge.s32.totalorder %s29, 2
    %s31 = scalar_select %p30, 0, %s29
    %s32 = ssub.s32 %s19, %s31
    %s33 = ssub.s32 %s20, %s27
    %s34 = sor.u32 %s32, %s33
    %p35 = scmp.eq.s32.totalorder %s34, 0
    %s37 = sadd.s32 %s36, 1
    %s38 = scalar_select %p35, %s36, %s37
    %p41 = pneg %p35
    %p42 = scmp.eq.s32.totalorder %s12, 1
    %p43 = por %p41, %p42
    %p44 = scmp.ne.s32.totalorder %s36, %s39
    %p45 = scmp.eq.s32.totalorder %s12, 0
    %p46 = por %p44, %p45
    %p47 = scmp.ne.s32.totalorder %s36, %s39
    %p48 = scmp.eq.s32.totalorder %s17, 1
    %p49 = por %p47, %p48
    %p50 = scmp.ne.s32.totalorder %s39, %s40
    %p51 = scmp.eq.s32.totalorder %s17, 0
    %p52 = por %p50, %p51
    %p53 = scmp.ne.s32.totalorder %s39, %s40
    %p54 = scmp.eq.s32.totalorder %s18, 1
    %p55 = por %p53, %p54
    %p57 = scmp.ne.s32.totalorder %s40, %s56
    %p58 = scmp.eq.s32.totalorder %s18, 0
    %p59 = por %p57, %p58
    %s61 = sadd.s32 %s60, 1
    %p64 = scmp.eq.s32.totalorder %s12, 1
    %p65 = scmp.ne.s32.totalorder %s60, %s62
    %p66 = scmp.eq.s32.totalorder %s12, 0
    %p67 = por %p65, %p66
    %p68 = scmp.ne.s32.totalorder %s60, %s62
    %p69 = scmp.eq.s32.totalorder %s17, 1
    %p70 = por %p68, %p69
    %p71 = scmp.ne.s32.totalorder %s62, %s63
    %p72 = scmp.eq.s32.totalorder %s17, 0
    %p73 = por %p71, %p72
    %p74 = scmp.ne.s32.totalorder %s62, %s63
    %p75 = scmp.eq.s32.totalorder %s18, 1
    %p76 = por %p74, %p75
    %p78 = scmp.ne.s32.totalorder %s63, %s77
    %p79 = scmp.eq.s32.totalorder %s18, 0
    %p80 = por %p78, %p79
    %s82 = sadd.s32 %s81, 1
    %p85 = scmp.eq.s32.totalorder %s12, 1
    %p86 = scmp.ne.s32.totalorder %s81, %s83
    %p87 = scmp.eq.s32.totalorder %s12, 0
    %p88 = por %p86, %p87
    %p89 = scmp.ne.s32.totalorder %s81, %s83
    %p90 = scmp.eq.s32.totalorder %s17, 1
    %p91 = por %p89, %p90
    %p92 = scmp.ne.s32.totalorder %s83, %s84
    %p93 = scmp.eq.s32.totalorder %s17, 0
    %p94 = por %p92, %p93
    %p95 = scmp.ne.s32.totalorder %s83, %s84
    %p96 = scmp.eq.s32.totalorder %s18, 1
    %p97 = por %p95, %p96
    %p99 = scmp.ne.s32.totalorder %s84, %s98
    %p100 = scmp.eq.s32.totalorder %s18, 0
    %p101 = por %p99, %p100
    %s102 = ssub.s32 %s19, %s31
    %s103 = ssub.s32 %s20, %s27
    %s104 = sor.u32 %s102, %s103
    %p105 = scmp.eq.s32.totalorder %s104, 0
    %s107 = sadd.s32 %s106, 1
    %s108 = scalar_select %p105, %s106, %s107
    %p111 = pneg %p105
    %p112 = scmp.eq.s32.totalorder %s12, 1
    %p113 = por %p111, %p112
    %p114 = scmp.ne.s32.totalorder %s106, %s109
    %p115 = scmp.eq.s32.totalorder %s12, 0
    %p116 = por %p114, %p115
    %p117 = scmp.ne.s32.totalorder %s106, %s109
    %p118 = scmp.eq.s32.totalorder %s17, 1
    %p119 = por %p117, %p118
    %p120 = scmp.ne.s32.totalorder %s109, %s110
    %p121 = scmp.eq.s32.totalorder %s17, 0
    %p122 = por %p120, %p121
    %p123 = scmp.ne.s32.totalorder %s109, %s110
    %p124 = scmp.eq.s32.totalorder %s18, 1
    %p125 = por %p123, %p124
    %p127 = scmp.ne.s32.totalorder %s110, %s126
    %p128 = scmp.eq.s32.totalorder %s18, 0
    %p129 = por %p127, %p128
    %s130 = ssub.s32 %s19, %s31
    %s131 = ssub.s32 %s20, %s27
    %s132 = sor.u32 %s130, %s131
    %p133 = scmp.eq.s32.totalorder %s132, 0
    %s135 = sadd.s32 %s134, 1
    %s136 = scalar_select %p133, %s134, %s135
    %p139 = pneg %p133
    %p140 = scmp.eq.s32.totalorder %s12, 1
    %p141 = por %p139, %p140
    %p142 = scmp.ne.s32.totalorder %s134, %s137
    %p143 = scmp.eq.s32.totalorder %s12, 0
    %p144 = por %p142, %p143
    %p145 = scmp.ne.s32.totalorder %s134, %s137
    %p146 = scmp.eq.s32.totalorder %s17, 1
    %p147 = por %p145, %p146
    %p148 = scmp.ne.s32.totalorder %s137, %s138
    %p149 = scmp.eq.s32.totalorder %s17, 0
    %p150 = por %p148, %p149
    %p151 = scmp.ne.s32.totalorder %s137, %s138
    %p152 = scmp.eq.s32.totalorder %s18, 1
    %p153 = por %p151, %p152
    %p155 = scmp.ne.s32.totalorder %s138, %s154
    %p156 = scmp.eq.s32.totalorder %s18, 0
    %p157 = por %p155, %p156
    %s158 = ssub.s32 %s19, %s31
    %s159 = ssub.s32 %s20, %s27
    %s160 = sor.u32 %s158, %s159
    %p161 = scmp.eq.s32.totalorder %s160, 0
    %s163 = sadd.s32 %s162, 1
    %s164 = scalar_select %p161, %s162, %s163
    %p167 = pneg %p161
    %p168 = scmp.eq.s32.totalorder %s12, 1
    %p169 = por %p167, %p168
    %p170 = scmp.ne.s32.totalorder %s162, %s165
    %p171 = scmp.eq.s32.totalorder %s12, 0
    %p172 = por %p170, %p171
    %p173 = scmp.ne.s32.totalorder %s162, %s165
    %p174 = scmp.eq.s32.totalorder %s17, 1
    %p175 = por %p173, %p174
    %p176 = scmp.ne.s32.totalorder %s165, %s166
    %p177 = scmp.eq.s32.totalorder %s17, 0
    %p178 = por %p176, %p177
    %p179 = scmp.ne.s32.totalorder %s165, %s166
    %p180 = scmp.eq.s32.totalorder %s18, 1
    %p181 = por %p179, %p180
    %p183 = scmp.ne.s32.totalorder %s166, %s182
    %p184 = scmp.eq.s32.totalorder %s18, 0
    %p185 = por %p183, %p184
    %p186 = scmp.le.s32.totalorder 1, %s12
    %p187 = scmp.lt.s32.totalorder %s12, 3
    %p188 = pnand %p186, %p187
    %p189 = pneg %p188
    // Predicated region
    $region9: #{conv_block_forward.2} parent=5 // pred_check
      _
    $region10: #{conv_block_forward.2} parent=5 // pred_check_branch
      %191 = sbr.rel (%p188) target = $region12
    $region11: #{conv_block_forward.2} parent=5 // pred_region
      %s192 = ssub.s32 %s12, 1
      // Predicated region
      $region13: #{conv_block_forward.2} parent=11 // pred_check
        %p193 = pneg %p73
      $region14: #{conv_block_forward.2} parent=11 // pred_check_branch
        %195 = sbr.rel (%p193) target = $region16
      $region15: #{conv_block_forward.2} parent=11 // pred_region
        _
      $region16: #{conv_block_forward.2} parent=11 // pred_fallthru
        _
      // Predicated region
      $region17: #{conv_block_forward.2} parent=11 // pred_check
        %p196 = pneg %p94
      $region18: #{conv_block_forward.2} parent=11 // pred_check_branch
        %198 = sbr.rel (%p196) target = $region20
      $region19: #{conv_block_forward.2} parent=11 // pred_region
        _
      $region20: #{conv_block_forward.2} parent=11 // pred_fallthru
        _
    $region12: #{conv_block_forward.2} parent=5 // pred_fallthru
      _
    %p199 = scmp.lt.s32.totalorder %s12, 2
    // Predicated region
    $region21: #{conv_block_forward.2} parent=5 // pred_check
      %p200 = pneg %p199
    $region22: #{conv_block_forward.2} parent=5 // pred_check_branch
      %202 = sbr.rel (%p200) target = $region24
    $region23: #{conv_block_forward.2} parent=5 // pred_region
      // Predicated region
      $region25: #{conv_block_forward.2} parent=23 // pred_check
        %p203 = pneg %p46
      $region26: #{conv_block_forward.2} parent=23 // pred_check_branch
        %205 = sbr.rel (%p203) target = $region28
      $region27: #{conv_block_forward.2} parent=23 // pred_region
        %s206 = smul.u32 2, %s20
        %p207 = scmp.lt.s32.totalorder %s19, 1
        %s208 = scalar_select %p207, %s19, 1
        %p209 = scmp.lt.s32.totalorder %s206, 1
        %s210 = scalar_select %p209, %s206, 1
        %s211 = smul.addr %s208, 10
        %s212 = sadd.s32 %s210, %s211
        %s213 = smul.addr %s212, 8
        %s214 = scalar_lea.vmem %s0, %s213
        %s215 = smul.u32 2, %s20
      $region28: #{conv_block_forward.2} parent=23 // pred_fallthru
        _
    $region24: #{conv_block_forward.2} parent=5 // pred_fallthru
      _
    %p216 = scmp.le.s32.totalorder 1, %s12
    %p217 = scmp.lt.s32.totalorder %s12, 3
    %p218 = pnand %p216, %p217
    %p219 = pneg %p218
    // Predicated region
    $region29: #{conv_block_forward.2} parent=5 // pred_check
      _
    $region30: #{conv_block_forward.2} parent=5 // pred_check_branch
      %221 = sbr.rel (%p218) target = $region32
    $region31: #{conv_block_forward.2} parent=5 // pred_region
      %s222 = ssub.s32 %s12, 1
      %s223 = smul.u32 2, %s22
      %p224 = scmp.lt.s32.totalorder %s21, 1
      %s225 = scalar_select %p224, %s21, 1
      %p226 = scmp.lt.s32.totalorder %s223, 1
      %s227 = scalar_select %p226, %s223, 1
      %s228 = smul.addr %s225, 10
      %s229 = sadd.s32 %s227, %s228
      %s230 = smul.addr %s229, 8
      %s231 = scalar_lea.vmem %s0, %s230
      %p232 = pneg %p52
      %p233 = pneg %p49
      %p234 = pneg %p73
      %p235 = pneg %p70
      %p236 = pneg %p94
      %p237 = pneg %p91
      %p238 = pneg %p122
      %p239 = pneg %p119
      %s240 = smul.u32 2, %s22
      %p241 = scmp.lt.s32.totalorder %s21, 1
      %s242 = scalar_select %p241, %s21, 1
      %p243 = scmp.lt.s32.totalorder %s240, 1
      %s244 = scalar_select %p243, %s240, 1
      %s245 = smul.addr %s242, 2
      %s246 = sadd.s32 %s244, %s245
      %s247 = smul.addr %s246, 8
      %s248 = scalar_lea.vmem %s3, %s247
      %p249 = pneg %p150
      %p250 = pneg %p147
      %p251 = scmp.lt.s32.totalorder %s21, 1
      %s252 = scalar_select %p251, %s21, 1
      %p253 = scmp.lt.s32.totalorder %s22, 0
      %s254 = scalar_select %p253, %s22, 0
      %s255 = sadd.s32 %s254, %s252
      %s256 = smul.addr %s255, 8
      %s257 = scalar_lea.vmem %s4, %s256
      %p258 = pneg %p178
      %p259 = pneg %p175
      %p260 = scmp.lt.s32.totalorder %s21, 1
      %s261 = scalar_select %p260, %s21, 1
      %p262 = scmp.lt.s32.totalorder %s22, 0
      %s263 = scalar_select %p262, %s22, 0
      %s264 = sadd.s32 %s263, %s261
      %s265 = smul.addr %s264, 8
      %s266 = scalar_lea.vmem %s5, %s265
      %s267 = smul.u32 2, %s22
      %p268 = scmp.lt.s32.totalorder %s21, 1
      %s269 = scalar_select %p268, %s21, 1
      %p270 = scmp.lt.s32.totalorder %s267, 1
      %s271 = scalar_select %p270, %s267, 1
      %s272 = smul.addr %s269, 10
      %s273 = sadd.s32 %s271, %s272
      %s274 = smul.addr %s273, 8
      %s275 = scalar_lea.vmem %s0, %s274
      %s276 = smul.u32 2, %s22
      %s277 = smul.u32 2, %s22
      %p278 = scmp.lt.s32.totalorder %s21, 1
      %s279 = scalar_select %p278, %s21, 1
      %p280 = scmp.lt.s32.totalorder %s277, 1
      %s281 = scalar_select %p280, %s277, 1
      %s282 = smul.addr %s279, 2
      %s283 = sadd.s32 %s281, %s282
      %s284 = smul.addr %s283, 8
      %s285 = scalar_lea.vmem %s3, %s284
      %s286 = smul.u32 2, %s22
      %p287 = scmp.lt.s32.totalorder %s21, 1
      %s288 = scalar_select %p287, %s21, 1
      %p289 = scmp.lt.s32.totalorder %s22, 0
      %s290 = scalar_select %p289, %s22, 0
      %s291 = sadd.s32 %s290, %s288
      %s292 = smul.addr %s291, 8
      %s293 = scalar_lea.vmem %s4, %s292
      %p294 = scmp.lt.s32.totalorder %s21, 1
      %s295 = scalar_select %p294, %s21, 1
      %p296 = scmp.lt.s32.totalorder %s22, 0
      %s297 = scalar_select %p296, %s22, 0
      %s298 = sadd.s32 %s297, %s295
      %s299 = smul.addr %s298, 8
      %s300 = scalar_lea.vmem %s5, %s299
      %v301 = vld [vmem:[%s1] sm:$0xff]
      %v302 = vld [vmem:[%s275] sm:$0xff]
      %v303 = vld [vmem:[%s275 + $0x8] sm:$0xff]
      %v304 = vld [vmem:[%s275 + $0x10] sm:$0xff]
      %v305 = vld [vmem:[%s275 + $0x18] sm:$0xff]
      %v306 = vld [vmem:[%s275 + $0x20] sm:$0xff]
      %v307 = vld [vmem:[%s275 + $0x28] sm:$0xff]
      %v308 = vld [vmem:[%s275 + $0x30] sm:$0xff]
      %v309 = vld [vmem:[%s275 + $0x38] sm:$0xff]
      %v310 = vld [vmem:[%s275 + $0x40] sm:$0xf]
      %v311 = vld [vmem:[%s275 + $0x48] sm:$0xf]
      %v312 = vld [vmem:[%s2] sm:$0xff]
      %314 = vset.pattern.permute.xlu0 0
      %315 = vperm.xlu0 %314, %v312
      %v316 = vpop.permute.xlu0 %315
      %vm318 = vcmask 293888
      %v320 = vsel %vm318, %v301, 0
      %vm322 = vcmask 1043456
      %v324 = vsel %vm322, %v310, 0
      %v327 = vsel %vm322, %v311, 0
      %329 = vmatpush.msra.mxu0 0.0
      %330 = vmatpush.msra.mxu0 0.0
      %331 = vmatpush.msra.mxu0 0.0
      %332 = vmatpush.msra.mxu0 0.0
      %333 = vmatpush.msra.mxu0 0.0
      %334 = vmatpush.msra.mxu0 0.0
      %335 = vmatpush.msra.mxu0 0.0
      %336 = vmatpush.msra.mxu0 0.0
      %337 = vmatpush.msra.mxu0 0.0
      %338 = vmatpush.msra.mxu0 0.0
      %339 = vmatpush.msra.mxu0 0.0
      %340 = vmatpush.msra.mxu0 %v324
      %341 = vmatpush.msra.mxu0 %v308
      %342 = vmatpush.msra.mxu0 %v306
      %343 = vmatpush.msra.mxu0 %v304
      %344 = vmatpush.msra.mxu0 %v302
      %345 = vmatmul.f32.gmra.mxu0 %v320
      %v346 = vpop.f32.mrf.mxu0
      %v347 = vadd.f32 %v316, %v346
      %348 = vdwg.mxu0
      %349 = vmatpush.msra.mxu0 0.0
      %350 = vmatpush.msra.mxu0 0.0
      %351 = vmatpush.msra.mxu0 0.0
      %352 = vmatpush.msra.mxu0 0.0
      %353 = vmatpush.msra.mxu0 0.0
      %354 = vmatpush.msra.mxu0 0.0
      %355 = vmatpush.msra.mxu0 0.0
      %356 = vmatpush.msra.mxu0 0.0
      %357 = vmatpush.msra.mxu0 0.0
      %358 = vmatpush.msra.mxu0 0.0
      %359 = vmatpush.msra.mxu0 0.0
      %360 = vmatpush.msra.mxu0 %v327
      %361 = vmatpush.msra.mxu0 %v309
      %362 = vmatpush.msra.mxu0 %v307
      %363 = vmatpush.msra.mxu0 %v305
      %364 = vmatpush.msra.mxu0 %v303
      %365 = vmatmul.f32.gmra.mxu0 %v320
      %v366 = vpop.f32.mrf.mxu0
      %v367 = vadd.f32 %v316, %v366
      %368 = vdwg.mxu0
      %v369 = vmax.f32 %v347, 0.0
      %v370 = vmax.f32 %v367, 0.0
      %371 = vst [vmem:[%s285] sm:$0xff] %v369
      %372 = vst [vmem:[%s285 + $0x8] sm:$0xff] %v370
      %p373 = scmp.eq.s32.totalorder %s22, 0
      // Predicated region
      $region33: #{conv_block_forward.2} parent=31 // pred_check
        %p374 = pneg %p373
      $region34: #{conv_block_forward.2} parent=31 // pred_check_branch
        %376 = sbr.rel (%p374) target = $region36
      $region35: #{conv_block_forward.2} parent=31 // pred_region
        %s377 = smul.u32 %s22, 256
        %v378 = vlaneseq
        %v379 = vand.u32 %v378, 127
        %v380 = vadd.s32 %v379, 128
        %v381 = vstv %s377
        %v382 = vadd.s32 %v381, %v379
        %v383 = vadd.s32 %v381, %v380
        %vm384 = vcmp.lt.s32.totalorder %v382, 256
        %vm385 = vcmp.lt.s32.totalorder %v383, 256
        %v386 = vsel %vm384, %v369, 0.0
        %v387 = vsel %vm385, %v370, 0.0
        %v388 = vadd.f32 %v386, %v387
        %389 = vadd.xlane.f32.xlu0 %v388
        %v390 = vpop.xlane.xlu0 %389
        %vm391 = vcmask 7168
        %392 = vst.msk [vmem:[%s293] sm:$0xff] %vm391, %v390
        %v393 = vmul.f32 %v386, %v386
        %v394 = vmul.f32 %v387, %v387
        %v395 = vadd.f32 %v393, %v394
        %396 = vadd.xlane.f32.xlu0 %v395
        %v397 = vpop.xlane.xlu0 %396
        %398 = vst.msk [vmem:[%s300] sm:$0xff] %vm391, %v397
      $region36: #{conv_block_forward.2} parent=31 // pred_fallthru
        _
      %p399 = scmp.ne.s32.totalorder %s22, 0
      // Predicated region
      $region37: #{conv_block_forward.2} parent=31 // pred_check
        %p400 = pneg %p399
      $region38: #{conv_block_forward.2} parent=31 // pred_check_branch
        %402 = sbr.rel (%p400) target = $region40
      $region39: #{conv_block_forward.2} parent=31 // pred_region
        %v403 = vadd.f32 %v369, %v370
        %404 = vadd.xlane.f32.xlu0 %v403
        %v405 = vpop.xlane.xlu0 %404
        %vm406 = vcmask 7168
        %407 = vst.msk [vmem:[%s293] sm:$0xff] %vm406, %v405
        %v408 = vmul.f32 %v369, %v369
        %v409 = vmul.f32 %v370, %v370
        %v410 = vadd.f32 %v408, %v409
        %411 = vadd.xlane.f32.xlu0 %v410
        %v412 = vpop.xlane.xlu0 %411
        %413 = vst.msk [vmem:[%s300] sm:$0xff] %vm406, %v412
      $region40: #{conv_block_forward.2} parent=31 // pred_fallthru
        _
      %s414 = smul.u32 2, %s22
      %p415 = scmp.lt.s32.totalorder %s21, 1
      %s416 = scalar_select %p415, %s21, 1
      %p417 = scmp.lt.s32.totalorder %s414, 1
      %s418 = scalar_select %p417, %s414, 1
      %s419 = smul.addr %s416, 2
      %s420 = sadd.s32 %s418, %s419
      %s421 = smul.addr %s420, 8
      %s422 = scalar_lea.vmem %s3, %s421
      %p423 = scmp.lt.s32.totalorder %s21, 1
      %s424 = scalar_select %p423, %s21, 1
      %p425 = scmp.lt.s32.totalorder %s22, 0
      %s426 = scalar_select %p425, %s22, 0
      %s427 = sadd.s32 %s426, %s424
      %s428 = smul.addr %s427, 8
      %s429 = scalar_lea.vmem %s4, %s428
      %p430 = scmp.lt.s32.totalorder %s21, 1
      %s431 = scalar_select %p430, %s21, 1
      %p432 = scmp.lt.s32.totalorder %s22, 0
      %s433 = scalar_select %p432, %s22, 0
      %s434 = sadd.s32 %s433, %s431
      %s435 = smul.addr %s434, 8
      %s436 = scalar_lea.vmem %s5, %s435
      // Predicated region
      $region41: #{conv_block_forward.2} parent=31 // pred_check
        %p437 = pneg %p119
      $region42: #{conv_block_forward.2} parent=31 // pred_check_branch
        %439 = sbr.rel (%p437) target = $region44
      $region43: #{conv_block_forward.2} parent=31 // pred_region
        %s440 = smul.u32 2, %s22
      $region44: #{conv_block_forward.2} parent=31 // pred_fallthru
        _
      // Predicated region
      $region45: #{conv_block_forward.2} parent=31 // pred_check
        %p441 = pneg %p147
      $region46: #{conv_block_forward.2} parent=31 // pred_check_branch
        %443 = sbr.rel (%p441) target = $region48
      $region47: #{conv_block_forward.2} parent=31 // pred_region
        _
      $region48: #{conv_block_forward.2} parent=31 // pred_fallthru
        _
      // Predicated region
      $region49: #{conv_block_forward.2} parent=31 // pred_check
        %p444 = pneg %p175
      $region50: #{conv_block_forward.2} parent=31 // pred_check_branch
        %446 = sbr.rel (%p444) target = $region52
      $region51: #{conv_block_forward.2} parent=31 // pred_region
        _
      $region52: #{conv_block_forward.2} parent=31 // pred_fallthru
        _
    $region32: #{conv_block_forward.2} parent=5 // pred_fallthru
      _
    %p447 = scmp.le.s32.totalorder 2, %s12
    // Predicated region
    $region53: #{conv_block_forward.2} parent=5 // pred_check
      %p448 = pneg %p447
    $region54: #{conv_block_forward.2} parent=5 // pred_check_branch
      %450 = sbr.rel (%p448) target = $region56
    $region55: #{conv_block_forward.2} parent=5 // pred_region
      %s451 = ssub.s32 %s12, 2
      // Predicated region
      $region57: #{conv_block_forward.2} parent=55 // pred_check
        %p452 = pneg %p125
      $region58: #{conv_block_forward.2} parent=55 // pred_check_branch
        %454 = sbr.rel (%p452) target = $region60
      $region59: #{conv_block_forward.2} parent=55 // pred_region
        %s455 = smul.u32 2, %s24
        %p456 = scmp.lt.s32.totalorder %s23, 1
        %s457 = scalar_select %p456, %s23, 1
        %p458 = scmp.lt.s32.totalorder %s455, 1
        %s459 = scalar_select %p458, %s455, 1
        %s460 = smul.addr %s457, 2
        %s461 = sadd.s32 %s459, %s460
        %s462 = smul.addr %s461, 8
        %s463 = scalar_lea.vmem %s3, %s462
      $region60: #{conv_block_forward.2} parent=55 // pred_fallthru
        _
      // Predicated region
      $region61: #{conv_block_forward.2} parent=55 // pred_check
        %p464 = pneg %p153
      $region62: #{conv_block_forward.2} parent=55 // pred_check_branch
        %466 = sbr.rel (%p464) target = $region64
      $region63: #{conv_block_forward.2} parent=55 // pred_region
        %p467 = scmp.lt.s32.totalorder %s23, 1
        %s468 = scalar_select %p467, %s23, 1
        %p469 = scmp.lt.s32.totalorder %s24, 0
        %s470 = scalar_select %p469, %s24, 0
        %s471 = sadd.s32 %s470, %s468
        %s472 = smul.addr %s471, 8
        %s473 = scalar_lea.vmem %s4, %s472
      $region64: #{conv_block_forward.2} parent=55 // pred_fallthru
        _
      // Predicated region
      $region65: #{conv_block_forward.2} parent=55 // pred_check
        %p474 = pneg %p181
      $region66: #{conv_block_forward.2} parent=55 // pred_check_branch
        %476 = sbr.rel (%p474) target = $region68
      $region67: #{conv_block_forward.2} parent=55 // pred_region
        %p477 = scmp.lt.s32.totalorder %s23, 1
        %s478 = scalar_select %p477, %s23, 1
        %p479 = scmp.lt.s32.totalorder %s24, 0
        %s480 = scalar_select %p479, %s24, 0
        %s481 = sadd.s32 %s480, %s478
        %s482 = smul.addr %s481, 8
        %s483 = scalar_lea.vmem %s5, %s482
      $region68: #{conv_block_forward.2} parent=55 // pred_fallthru
        _
    $region56: #{conv_block_forward.2} parent=5 // pred_fallthru
      _
  $region6: #{conv_block_forward.2} parent=0 // loop_footer
    %s16 = sadd.s32 1, %s12
  $region7: #{conv_block_forward.2} parent=0 // loop_footer_branch
    %11 = sbr.rel target = $region3
  $region8: #{conv_block_forward.2} parent=0 // loop_exit
    _

</llo_original>
